<compile_context>
chip_gen: v6e
topology: v6e:2x2x1
jax: 0.10.0
libtpu: 0.0.40
codegen_flags: <defaults>
</compile_context>

<pallas_src>
import jax
import jax.numpy as jnp
from jax.experimental import pallas as pl
from jax.experimental.pallas import tpu as pltpu


def entailment_head_kernel(h_ref, w_ref, b_ref, o_ref):
    """One batch tile: logits = h_last_tile @ W + b, f32 accumulation on the MXU."""
    logits = jnp.dot(h_ref[...], w_ref[...], preferred_element_type=jnp.float32)
    o_ref[...] = (logits + b_ref[...].astype(jnp.float32)).astype(o_ref.dtype)


def entailment_head(h, w, b, *, tb_max=512):
    """
    h: (B, T, D) backbone hidden states
    w: (D, C)    linear weight (transpose of PyTorch nn.Linear layout)
    b: (C,) or (1, C) bias
    returns: (B, C) float32 logits of the final token's hidden state
    """
    B, T, D = h.shape
    C = w.shape[1]
    b = jnp.reshape(b, (1, C))

    # (1) Last-token select in the wrapper: only (B, D) ever reaches HBM->VMEM DMA.
    h_last = h[:, -1, :]

    # (2) Lane-dense output: pad class dim up to a multiple of 128.
    LANE = 128
    c_pad = ((C + LANE - 1) // LANE) * LANE
    if c_pad != C:
        w = jnp.pad(w, ((0, 0), (0, c_pad - C)))
        b = jnp.pad(b, ((0, 0), (0, c_pad - C)))

    # (3) Batch tile: multiple of 8 sublanes, capped at tb_max; pad B up to a tile.
    SUB = 8
    tb = min(tb_max, ((B + SUB - 1) // SUB) * SUB)
    tb = ((tb + SUB - 1) // SUB) * SUB
    b_pad = ((B + tb - 1) // tb) * tb
    if b_pad != B:
        h_last = jnp.pad(h_last, ((0, b_pad - B), (0, 0)))

    grid = (b_pad // tb,)

    # (4) Explicit VMEM budget: double-buffered activation/output tiles + resident
    #     weight/bias, clamped to stay portable to v7x's 64 MiB physical VMEM.
    itemsize = jnp.dtype(h_last.dtype).itemsize
    w_itemsize = jnp.dtype(w.dtype).itemsize
    tile_bytes = (2 * (tb * D * itemsize + tb * c_pad * 4)
                  + D * c_pad * w_itemsize + c_pad * 4)
    vmem_limit = int(min(48 << 20, max(2 * tile_bytes, 16 << 20)))

    out = pl.pallas_call(
        entailment_head_kernel,
        out_shape=jax.ShapeDtypeStruct((b_pad, c_pad), jnp.float32),
        grid=grid,
        in_specs=[
            pl.BlockSpec((tb, D), lambda i: (i, 0)),        # batch tile of last-token states
            pl.BlockSpec((D, c_pad), lambda i: (0, 0)),     # weight, resident across grid
            pl.BlockSpec((1, c_pad), lambda i: (0, 0)),     # bias, resident across grid
        ],
        out_specs=pl.BlockSpec((tb, c_pad), lambda i: (i, 0)),
        compiler_params=pltpu.CompilerParams(
            dimension_semantics=("parallel",),
            vmem_limit_bytes=vmem_limit,
        ),
    )(h_last, w, b)

    # Strip batch padding and lane padding.
    return out[:B, :C]


if __name__ == "__main__":
    # Small, deterministic example shapes: batch=2, seq=8, hidden=32, n_classes=4.
    B, T, D, C = 2, 8, 32, 4
    key = jax.random.PRNGKey(0)
    k_h, k_w, k_b = jax.random.split(key, 3)

    # "Backbone output" hidden states (stand-in for the transformer the head wraps).
    h = jax.random.normal(k_h, (B, T, D), dtype=jnp.float32)

    # nn.Linear(D, C) parameters, initialized deterministically in-script.
    w = jax.random.normal(k_w, (D, C), dtype=jnp.float32) * 0.02
    b = jax.random.normal(k_b, (1, C), dtype=jnp.float32) * 0.02

    logits = entailment_head(h, w, b)
    logits = jax.block_until_ready(logits)

    # Pure-JAX reference for correctness.
    ref = h[:, -1, :] @ w + b
    assert logits.shape == (B, C)
    assert jnp.allclose(logits, ref, atol=1e-5, rtol=1e-5), "mismatch vs reference"

    print("KERNEL_OK")
</pallas_src>

<mosaic_0001>
module attributes {stable_mosaic.version = 11 : i64} {
  func.func @entailment_head_kernel(%arg0: i32, %arg1: memref<8x32xf32, #tpu.memory_space<vmem>>, %arg2: memref<32x128xf32, #tpu.memory_space<vmem>>, %arg3: memref<1x128xf32, #tpu.memory_space<vmem>>, %arg4: memref<8x128xf32, #tpu.memory_space<vmem>>) attributes {dimension_semantics = [#tpu.dimension_semantics<parallel>], iteration_bounds = array<i64: 1>, scalar_prefetch = 0 : i64, scratch_operands = 0 : i64, tpu.core_type = #tpu.core_type<tc>, window_params = [{transform_indices = @transform_0, window_bounds = array<i64: 8, 32>}, {pipeline_mode = #tpu.pipeline_mode<synchronous>, transform_indices = @transform_1, window_bounds = array<i64: 32, 128>}, {pipeline_mode = #tpu.pipeline_mode<synchronous>, transform_indices = @transform_2, window_bounds = array<i64: 1, 128>}, {transform_indices = @transform_3, window_bounds = array<i64: 8, 128>}]} {
    %c0 = arith.constant 0 : index
    %c0_0 = arith.constant 0 : index
    %0 = vector.load %arg1[%c0, %c0_0] : memref<8x32xf32, #tpu.memory_space<vmem>>, vector<8x32xf32>
    %c0_1 = arith.constant 0 : index
    %c0_2 = arith.constant 0 : index
    %1 = vector.load %arg2[%c0_1, %c0_2] : memref<32x128xf32, #tpu.memory_space<vmem>>, vector<32x128xf32>
    %cst = arith.constant dense<0.000000e+00> : vector<8x128xf32>
    %2 = tpu.matmul %0, %1, %cst {dimension_numbers = #tpu.dot_dimension_numbers<[1], [0], [0], [1], [0, 0, 1, 1], [], []>} : vector<8x32xf32>, vector<32x128xf32>, vector<8x128xf32> -> vector<8x128xf32>
    %c0_3 = arith.constant 0 : index
    %c0_4 = arith.constant 0 : index
    %3 = vector.load %arg3[%c0_3, %c0_4] : memref<1x128xf32, #tpu.memory_space<vmem>>, vector<1x128xf32>
    %4 = vector.broadcast %3 : vector<1x128xf32> to vector<8x128xf32>
    %5 = arith.addf %2, %4 : vector<8x128xf32>
    %c0_5 = arith.constant 0 : index
    %c0_6 = arith.constant 0 : index
    %6 = vector.load %arg4[%c0_5, %c0_6] : memref<8x128xf32, #tpu.memory_space<vmem>>, vector<8x128xf32>
    tpu.vector_store %arg4[%c0_5, %c0_6], %5 {strides = array<i32>} : memref<8x128xf32, #tpu.memory_space<vmem>>, vector<8x128xf32>,
    return
  }
  func.func @transform_0(%arg0: i32) -> (i32, i32) {
    %c0_i32 = arith.constant 0 : i32
    %c0_i32_0 = arith.constant 0 : i32
    return %arg0, %c0_i32 : i32, i32
  }
  func.func @transform_1(%arg0: i32) -> (i32, i32) {
    %c0_i32 = arith.constant 0 : i32
    %c0_i32_0 = arith.constant 0 : i32
    %c0_i32_1 = arith.constant 0 : i32
    return %c0_i32, %c0_i32_0 : i32, i32
  }
  func.func @transform_2(%arg0: i32) -> (i32, i32) {
    %c0_i32 = arith.constant 0 : i32
    %c0_i32_0 = arith.constant 0 : i32
    %c0_i32_1 = arith.constant 0 : i32
    return %c0_i32, %c0_i32_0 : i32, i32
  }
  func.func @transform_3(%arg0: i32) -> (i32, i32) {
    %c0_i32 = arith.constant 0 : i32
    %c0_i32_0 = arith.constant 0 : i32
    return %arg0, %c0_i32 : i32, i32
  }
}

</mosaic_0001>

<llo_original>
// kernel: tpu_custom_call.1
$region0: #{tpu_custom_call.1}
  #allocation0 [shape = 'u32[]', space=smem, size = 0x4, offset = 0x4, fixed_abs, tag = 'smem constant byte address 0x4 - core index']
  #allocation1 [shape = 'u32[144,128]{1,0:T(1,128)}', space=vmem, size = 0x12000, scoped, tag = 'internal scratch']
  %s0 = inlined_call_operand.hbm [shape: f32[8,32], index: 0, kind: input, shape index: {}]
  %s1 = inlined_call_operand.hbm [shape: f32[32,128], index: 1, kind: input, shape index: {}]
  %s2 = inlined_call_operand.vmem [shape: f32[1,128], index: 2, kind: input, shape index: {}]
  %s3 = inlined_call_operand.hbm [shape: f32[8,128], index: 3, kind: output, shape index: {}]
  %s4 = sld [smem:[#allocation0]]
  $region30: #{tpu_custom_call.1} parent=0
    _
  %s6 = ssub.s32 1, %s4
  %s7 = scalar_select 0, %s6, %s4
  $region1: #{tpu_custom_call.1} parent=0
    #allocation2 [shape = 'u8[4096]{0}', space=vmem, size = 0x1000, scoped, tag = 'input window, operand 0, single buffered']
    #allocation3 [shape = 's32[1]{0}', space=sflag, size = 0x4, scoped, tag = 'scoped memory for tpu_custom_call.1']
    #allocation4 [shape = 's32[1]{0}', space=sflag, size = 0x4, scoped, tag = 'scoped memory for tpu_custom_call.1']
    #allocation5 [shape = 'u8[16384]{0}', space=vmem, size = 0x4000, scoped, tag = 'input window, operand 1, single buffered']
    #allocation6 [shape = 's32[1]{0}', space=sflag, size = 0x4, scoped, tag = 'scoped memory for tpu_custom_call.1']
    #allocation7 [shape = 'u8[4096]{0}', space=vmem, size = 0x1000, scoped, tag = 'output window, operand 0, single buffered']
    %8 = vsyncpa [#allocation3], 0
    %9 = vsyncpa [#allocation6], 0
    %10 = vsyncpa [#allocation4], 0
    // Predicated region
    $region2: #{tpu_custom_call.1} parent=1 // pred_check
      _
    $region3: #{tpu_custom_call.1} parent=1 // pred_check_branch
      %12 = sbr.rel (0) target = $region5
    $region4: #{tpu_custom_call.1} parent=1 // pred_region
      %s14 = ssub.s32 128, 128
      %15 = vsyncadd [#allocation3], %s14
      %s17 = sshll.u32 [#allocation2], 4
      %s18 = int_to_ptr.vmem [resolvable:$true] %s17
      %20 = dma.hbm_to_vmem [thread:$0]  %s0, 128, %s18, [#allocation3]
    $region5: #{tpu_custom_call.1} parent=1 // pred_fallthru
      _
    // Predicated region
    $region6: #{tpu_custom_call.1} parent=1 // pred_check
      _
    $region7: #{tpu_custom_call.1} parent=1 // pred_check_branch
      %22 = sbr.rel (0) target = $region9
    $region8: #{tpu_custom_call.1} parent=1 // pred_region
      %s24 = ssub.s32 512, 512
      %25 = vsyncadd [#allocation6], %s24
      %s26 = sshll.u32 [#allocation5], 4
      %s27 = int_to_ptr.vmem [resolvable:$true] %s26
      %32 = dma.hbm_to_vmem [thread:$0]  %s1, 512, %s27, [#allocation6], 128, 128, 8
    $region9: #{tpu_custom_call.1} parent=1 // pred_fallthru
      _
    // Predicated region
    $region10: #{tpu_custom_call.1} parent=1 // pred_check
      _
    $region11: #{tpu_custom_call.1} parent=1 // pred_check_branch
      %34 = sbr.rel (0) target = $region13
    $region12: #{tpu_custom_call.1} parent=1 // pred_region
      _
    $region13: #{tpu_custom_call.1} parent=1 // pred_fallthru
      _
    // Predicated region
    $region14: #{tpu_custom_call.1} parent=1 // pred_check
      _
    $region15: #{tpu_custom_call.1} parent=1 // pred_check_branch
      %36 = sbr.rel (0) target = $region17
    $region16: #{tpu_custom_call.1} parent=1 // pred_region
      %37 = dma.done [#allocation3], 128
    $region17: #{tpu_custom_call.1} parent=1 // pred_fallthru
      _
    // Predicated region
    $region18: #{tpu_custom_call.1} parent=1 // pred_check
      _
    $region19: #{tpu_custom_call.1} parent=1 // pred_check_branch
      %39 = sbr.rel (0) target = $region21
    $region20: #{tpu_custom_call.1} parent=1 // pred_region
      %40 = dma.done [#allocation6], 512
    $region21: #{tpu_custom_call.1} parent=1 // pred_fallthru
      _
    %v41 = vld [vmem:[#allocation2] sm:$0xff]
    %v42 = vld [vmem:[#allocation5] sm:$0xff]
    %v43 = vld [vmem:[#allocation5 + $0x8] sm:$0xff]
    %v44 = vld [vmem:[#allocation5 + $0x10] sm:$0xff]
    %v45 = vld [vmem:[#allocation5 + $0x18] sm:$0xff]
    %v46 = vld [vmem:[%s2] sm:$0x1]
    %v48 = vlaneseq
    %v49 = vshrl.u32 %v48, 7
    %v50 = vsub.s32 0, %v49
    %v51 = vrot.slane %v46, %v50
    %vm53 = vcmask 261120
    %v55 = vsel %vm53, %v41, 0
    %57 = vmatprep.subr.mxu0 0.0
    %58 = vmatpush1.msra.mxu0 0.0
    %59 = vmatprep.subr.mxu0 0.0
    %60 = vmatpush1.msra.mxu0 0.0
    %61 = vmatprep.subr.mxu0 0.0
    %62 = vmatpush1.msra.mxu0 0.0
    %63 = vmatprep.subr.mxu0 0.0
    %64 = vmatpush1.msra.mxu0 0.0
    %65 = vmatprep.subr.mxu0 0.0
    %66 = vmatpush1.msra.mxu0 0.0
    %67 = vmatprep.subr.mxu0 0.0
    %68 = vmatpush1.msra.mxu0 0.0
    %69 = vmatprep.subr.mxu0 0.0
    %70 = vmatpush1.msra.mxu0 0.0
    %71 = vmatprep.subr.mxu0 0.0
    %72 = vmatpush1.msra.mxu0 0.0
    %73 = vmatprep.subr.mxu0 0.0
    %74 = vmatpush1.msra.mxu0 0.0
    %75 = vmatprep.subr.mxu0 0.0
    %76 = vmatpush1.msra.mxu0 0.0
    %77 = vmatprep.subr.mxu0 0.0
    %78 = vmatpush1.msra.mxu0 0.0
    %79 = vmatprep.subr.mxu0 0.0
    %80 = vmatpush1.msra.mxu0 0.0
    %81 = vmatprep.subr.mxu0 0.0
    %82 = vmatpush1.msra.mxu0 %v45
    %83 = vmatprep.subr.mxu0 0.0
    %84 = vmatpush1.msra.mxu0 %v44
    %85 = vmatprep.subr.mxu0 0.0
    %86 = vmatpush1.msra.mxu0 %v43
    %87 = vmatprep.subr.mxu0 0.0
    %88 = vmatpush1.msra.mxu0 %v42
    %89 = vmatprep.subr.mxu0 0.0
    %90 = vmatpush2.msra.mxu0 0.0
    %91 = vmatprep.subr.mxu0 0.0
    %92 = vmatpush2.msra.mxu0 0.0
    %93 = vmatprep.subr.mxu0 0.0
    %94 = vmatpush2.msra.mxu0 0.0
    %95 = vmatprep.subr.mxu0 0.0
    %96 = vmatpush2.msra.mxu0 0.0
    %97 = vmatprep.subr.mxu0 0.0
    %98 = vmatpush2.msra.mxu0 0.0
    %99 = vmatprep.subr.mxu0 0.0
    %100 = vmatpush2.msra.mxu0 0.0
    %101 = vmatprep.subr.mxu0 0.0
    %102 = vmatpush2.msra.mxu0 0.0
    %103 = vmatprep.subr.mxu0 0.0
    %104 = vmatpush2.msra.mxu0 0.0
    %105 = vmatprep.subr.mxu0 0.0
    %106 = vmatpush2.msra.mxu0 0.0
    %107 = vmatprep.subr.mxu0 0.0
    %108 = vmatpush2.msra.mxu0 0.0
    %109 = vmatprep.subr.mxu0 0.0
    %110 = vmatpush2.msra.mxu0 0.0
    %111 = vmatprep.subr.mxu0 0.0
    %112 = vmatpush2.msra.mxu0 0.0
    %113 = vmatprep.subr.mxu0 0.0
    %114 = vmatpush2.msra.mxu0 0.0
    %115 = vmatprep.subr.mxu0 0.0
    %116 = vmatpush2.msra.mxu0 0.0
    %117 = vmatprep.subr.mxu0 0.0
    %118 = vmatpush2.msra.mxu0 0.0
    %119 = vmatprep.subr.mxu0 0.0
    %120 = vmatpush2.msra.mxu0 0.0
    %121 = vmatprep.mubr.f32.mxu0 0.0
    %122 = vmatmul.mubr.f32.gmra.mxu0 %v55
    %v123 = vpop.f32.mrf.mxu0
    %v124 = vadd.f32 %v51, %v123
    %v125 = vpop.f32.mrf.mxu0
    %126 = vdwg.mxu0
    %127 = vst [vmem:[#allocation7] sm:$0xff] %v124
    // Predicated region
    $region22: #{tpu_custom_call.1} parent=1 // pred_check
      _
    $region23: #{tpu_custom_call.1} parent=1 // pred_check_branch
      %129 = sbr.rel (0) target = $region25
    $region24: #{tpu_custom_call.1} parent=1 // pred_region
      %s131 = ssub.s32 128, 128
      %132 = vsyncadd [#allocation4], %s131
      %s134 = sshll.u32 [#allocation7], 4
      %s135 = int_to_ptr.vmem [resolvable:$true] %s134
      %137 = dma.vmem_to_hbm [thread:$0]  %s135, 128, %s3, [#allocation4]
    $region25: #{tpu_custom_call.1} parent=1 // pred_fallthru
      _
    // Predicated region
    $region26: #{tpu_custom_call.1} parent=1 // pred_check
      _
    $region27: #{tpu_custom_call.1} parent=1 // pred_check_branch
      %139 = sbr.rel (0) target = $region29
    $region28: #{tpu_custom_call.1} parent=1 // pred_region
      %140 = dma.done [#allocation4], 128
    $region29: #{tpu_custom_call.1} parent=1 // pred_fallthru
      _
    %141 = vsyncpa [#allocation3], 1
    %142 = vsyncpa [#allocation6], 1
    %143 = vsyncpa [#allocation4], 1

</llo_original>
